<compile_context>
chip_gen: v5e
topology: v5e:2x2
jax: 0.10.0
libtpu: 0.0.40
codegen_flags: <defaults>
</compile_context>

<pallas_src>
import jax
import jax.numpy as jnp
from jax import lax
from jax.experimental import pallas as pl
from jax.experimental.pallas import tpu as pltpu

_LANES = 128
_ROW_TILE = 8192  # 8192 rows * 128 lanes * 4 B = 4 MiB per f32 operand per buffer


def _round_up(x: int, m: int) -> int:
    return ((x + m - 1) // m) * m


def _sublane_align(dtype) -> int:
    # (8,128) native tile for 32-bit, (16,128) for 16-bit, (32,128) for 8-bit.
    return max(8, 32 // max(1, jnp.dtype(dtype).itemsize))


def _make_l1_partial_kernel(tile_rows: int, total_rows: int, need_mask: bool):
    """Per-block partial sum of |a - b|, emitted as a lane-dense (8,128) tile."""

    def partial_tile(diff):
        # (tile_rows,128) -> (tile_rows//8, 8, 128) groups whole vregs
        # (sublane-major split, no data movement); summing axis 0 is pure VPU
        # vreg adds.  Result is a single (8,128) vreg stored with an unmasked
        # 128-wide vst.
        return diff.reshape(tile_rows // 8, 8, _LANES).sum(axis=0)[None]

    def kernel(a_ref, b_ref, o_ref):
        # In-kernel upcast: HBM traffic stays at the input dtype width.
        a = a_ref[...].astype(jnp.float32)
        b = b_ref[...].astype(jnp.float32)
        diff = jnp.abs(a - b)

        if need_mask:
            i = pl.program_id(0)
            last = pl.num_programs(0) - 1

            @pl.when(i != last)
            def _():
                o_ref[...] = partial_tile(diff)

            @pl.when(i == last)
            def _():
                # Only the final (ragged) block pays for the mask: rows past
                # the logical end hold unspecified padding -> select to zero.
                row_ids = i * tile_rows + lax.broadcasted_iota(
                    jnp.int32, (tile_rows, 1), 0
                )
                o_ref[...] = partial_tile(
                    jnp.where(row_ids < total_rows, diff, 0.0)
                )
        else:
            o_ref[...] = partial_tile(diff)

    return kernel


def l1_loss(output: jax.Array, target: jax.Array, *, row_tile: int = _ROW_TILE) -> jax.Array:
    """mean(|output - target|) via a bandwidth-bound Pallas TPU reduction."""
    if output.shape != target.shape:
        raise ValueError(f"shape mismatch: {output.shape} vs {target.shape}")

    n = output.size
    a = output.reshape(-1)
    b = target.reshape(-1)

    if n == 0:
        # torch: mean of an empty tensor is NaN.
        return jnp.float32(jnp.nan)

    if n % _LANES != 0:
        # A non-128-multiple flat size would require a prefix-slice copy of
        # both operands in HBM just to feed the kernel (slices can't fuse into
        # a custom call) — that copy costs more than the reduction.  XLA's
        # fused single-pass reduction is the faster path here.
        return jnp.mean(jnp.abs(a.astype(jnp.float32) - b.astype(jnp.float32)))

    rows = n // _LANES
    a2 = a.reshape(rows, _LANES)  # zero-copy reshapes of contiguous buffers
    b2 = b.reshape(rows, _LANES)

    # Packing-friendly sublane alignment for the narrower operand dtype.
    sub = max(_sublane_align(output.dtype), _sublane_align(target.dtype))

    # Guarantee >=2 grid steps when there is enough work (v7x: both TCs busy),
    # capped at row_tile to bound per-step VMEM.
    tile_rows = min(row_tile, _round_up(pl.cdiv(rows, 2), sub))
    tile_rows = max(tile_rows, sub)
    num_blocks = pl.cdiv(rows, tile_rows)
    need_mask = (rows % tile_rows) != 0

    partials = pl.pallas_call(
        _make_l1_partial_kernel(tile_rows, rows, need_mask),
        out_shape=jax.ShapeDtypeStruct((num_blocks, 8, _LANES), jnp.float32),
        grid_spec=pltpu.PrefetchScalarGridSpec(
            num_scalar_prefetch=0,
            grid=(num_blocks,),
            in_specs=[
                pl.BlockSpec((tile_rows, _LANES), lambda i: (i, 0)),
                pl.BlockSpec((tile_rows, _LANES), lambda i: (i, 0)),
            ],
            out_specs=pl.BlockSpec((1, 8, _LANES), lambda i: (i, 0, 0)),
        ),
        compiler_params=pltpu.CompilerParams(
            dimension_semantics=("parallel",),
            vmem_limit_bytes=32 * 1024 * 1024,
        ),
    )(a2, b2)

    return jnp.sum(partials) / jnp.float32(n)


if __name__ == "__main__":
    key = jax.random.PRNGKey(0)
    k1, k2 = jax.random.split(key)
    # Small NCHW inputs consistent with the flow-loss usage.
    output = jax.random.normal(k1, (2, 4, 16, 16), dtype=jnp.float32)
    target = jax.random.normal(k2, (2, 4, 16, 16), dtype=jnp.float32)

    loss = l1_loss(output, target)
    loss = jax.block_until_ready(loss)

    ref = jnp.mean(jnp.abs(output.astype(jnp.float32) - target.astype(jnp.float32)))
    assert loss.shape == (), loss.shape
    assert loss.dtype == jnp.float32, loss.dtype
    assert jnp.allclose(loss, ref, rtol=1e-6, atol=1e-6), (loss, ref)

    print("KERNEL_OK")
</pallas_src>

<mosaic_0001>
module attributes {stable_mosaic.version = 11 : i64} {
  func.func @kernel(%arg0: i32, %arg1: memref<8x128xf32, #tpu.memory_space<vmem>>, %arg2: memref<8x128xf32, #tpu.memory_space<vmem>>, %arg3: memref<1x8x128xf32, #tpu.memory_space<vmem>>) attributes {dimension_semantics = [#tpu.dimension_semantics<parallel>], iteration_bounds = array<i64: 2>, scalar_prefetch = 0 : i64, scratch_operands = 0 : i64, tpu.core_type = #tpu.core_type<tc>, window_params = [{transform_indices = @transform_0, window_bounds = array<i64: 8, 128>}, {transform_indices = @transform_1, window_bounds = array<i64: 8, 128>}, {transform_indices = @transform_2, window_bounds = array<i64: 1, 8, 128>}]} {
    %c0 = arith.constant 0 : index
    %c0_0 = arith.constant 0 : index
    %0 = vector.load %arg1[%c0, %c0_0] : memref<8x128xf32, #tpu.memory_space<vmem>>, vector<8x128xf32>
    %c0_1 = arith.constant 0 : index
    %c0_2 = arith.constant 0 : index
    %1 = vector.load %arg2[%c0_1, %c0_2] : memref<8x128xf32, #tpu.memory_space<vmem>>, vector<8x128xf32>
    %2 = arith.subf %0, %1 : vector<8x128xf32>
    %3 = math.absf %2 : vector<8x128xf32>
    %4 = vector.shape_cast %3 : vector<8x128xf32> to vector<1x8x128xf32>
    %cst = arith.constant dense<0.000000e+00> : vector<8x128xf32>
    %5 = vector.multi_reduction <add>, %4, %cst [0] : vector<1x8x128xf32> to vector<8x128xf32>
    %6 = vector.shape_cast %5 : vector<8x128xf32> to vector<1x8x128xf32>
    %c0_3 = arith.constant 0 : index
    %c0_4 = arith.constant 0 : index
    %c0_5 = arith.constant 0 : index
    %7 = vector.load %arg3[%c0_3, %c0_4, %c0_5] : memref<1x8x128xf32, #tpu.memory_space<vmem>>, vector<1x8x128xf32>
    tpu.vector_store %arg3[%c0_3, %c0_4, %c0_5], %6 {strides = array<i32>} : memref<1x8x128xf32, #tpu.memory_space<vmem>>, vector<1x8x128xf32>,
    return
  }
  func.func @transform_0(%arg0: i32) -> (i32, i32) {
    %c0_i32 = arith.constant 0 : i32
    %c0_i32_0 = arith.constant 0 : i32
    return %arg0, %c0_i32 : i32, i32
  }
  func.func @transform_1(%arg0: i32) -> (i32, i32) {
    %c0_i32 = arith.constant 0 : i32
    %c0_i32_0 = arith.constant 0 : i32
    return %arg0, %c0_i32 : i32, i32
  }
  func.func @transform_2(%arg0: i32) -> (i32, i32, i32) {
    %c0_i32 = arith.constant 0 : i32
    %c0_i32_0 = arith.constant 0 : i32
    %c0_i32_1 = arith.constant 0 : i32
    return %arg0, %c0_i32, %c0_i32_0 : i32, i32, i32
  }
}

</mosaic_0001>

<llo_original>
// kernel: tpu_custom_call.1
$region0: #{tpu_custom_call.1}
  #allocation0 [shape = 'u32[]', space=smem, size = 0x4, offset = 0x4, fixed_abs, tag = 'smem constant byte address 0x4 - core index']
  #allocation1 [shape = 'u32[72,128]{1,0:T(1,128)}', space=vmem, size = 0x9000, scoped, tag = 'internal scratch']
  %s0 = inlined_call_operand.hbm [shape: f32[16,128], index: 0, kind: input, shape index: {}]
  %s1 = inlined_call_operand.hbm [shape: f32[16,128], index: 1, kind: input, shape index: {}]
  %s2 = inlined_call_operand.hbm [shape: f32[2,8,128], index: 2, kind: output, shape index: {}]
  %s3 = sld [smem:[#allocation0]]
  $region49: #{tpu_custom_call.1} parent=0
    _
  %s5 = ssub.s32 1, %s3
  %s6 = scalar_select 0, %s5, %s3
  $region1: #{tpu_custom_call.1} parent=0
    #allocation2 [shape = 'u8[8192]{0}', space=vmem, size = 0x2000, scoped, tag = 'input window, operand 0']
    #allocation3 [shape = 's32[2]{0}', space=sflag, size = 0x8, scoped, tag = 'scoped memory for tpu_custom_call.1']
    #allocation4 [shape = 's32[2]{0}', space=sflag, size = 0x8, scoped, tag = 'scoped memory for tpu_custom_call.1']
    #allocation5 [shape = 'u8[8192]{0}', space=vmem, size = 0x2000, scoped, tag = 'input window, operand 1']
    #allocation6 [shape = 's32[2]{0}', space=sflag, size = 0x8, scoped, tag = 'scoped memory for tpu_custom_call.1']
    #allocation7 [shape = 'u8[8192]{0}', space=vmem, size = 0x2000, scoped, tag = 'output window, operand 0']
    %7 = vsyncpa [#allocation3], 0
    %s8 = scalar_lea.sflag [#allocation3], 1
    %9 = vsyncpa %s8, 0
    %10 = vsyncpa [#allocation6], 0
    %s11 = scalar_lea.sflag [#allocation6], 1
    %12 = vsyncpa %s11, 0
    %13 = vsyncpa [#allocation4], 0
    %s14 = scalar_lea.sflag [#allocation4], 1
    %15 = vsyncpa %s14, 0
    loop: start=0, step=1, limit=4
    $region2: #{tpu_custom_call.1} parent=1 // loop_pre_header
      _
    $region3: #{tpu_custom_call.1} parent=1 // loop_header
      %s17 = sphi 0, %s21
      %p18 = scmp.ge.s32.totalorder %s17, 4
      %s27 = sphi 0, %s29
      %s30 = sphi 0, %s27
      %s31 = sphi 0, %s30
      %s47 = sphi 0, %s31
      %s53 = sphi 0, %s55
      %s56 = sphi 0, %s53
      %s57 = sphi 0, %s56
      %s73 = sphi 0, %s57
      %s79 = sphi 0, %s81
      %s82 = sphi 0, %s79
      %s83 = sphi 0, %s82
      %s99 = sphi 0, %s83
    $region4: #{tpu_custom_call.1} parent=1 // loop_header_branch
      %20 = sbr.rel (%p18) target = $region8
    $region5: #{tpu_custom_call.1} parent=1 // loop_body
      %s22 = ssub.s32 %s17, 1
      %s23 = ssub.s32 %s17, 2
      %s24 = sadd.s32 %s17, 1
      %s25 = ssub.s32 %s17, %s24
      %p26 = scmp.eq.s32.totalorder %s25, 0
      %s28 = sadd.s32 %s27, 1
      %s29 = scalar_select %p26, %s27, %s28
      %p32 = pneg %p26
      %p33 = scmp.eq.s32.totalorder %s17, 1
      %p34 = por %p32, %p33
      %p35 = scmp.ne.s32.totalorder %s27, %s30
      %p36 = scmp.eq.s32.totalorder %s17, 0
      %p37 = por %p35, %p36
      %p38 = scmp.ne.s32.totalorder %s27, %s30
      %p39 = scmp.eq.s32.totalorder %s22, 1
      %p40 = por %p38, %p39
      %p41 = scmp.ne.s32.totalorder %s30, %s31
      %p42 = scmp.eq.s32.totalorder %s22, 0
      %p43 = por %p41, %p42
      %p44 = scmp.ne.s32.totalorder %s30, %s31
      %p45 = scmp.eq.s32.totalorder %s23, 1
      %p46 = por %p44, %p45
      %p48 = scmp.ne.s32.totalorder %s31, %s47
      %p49 = scmp.eq.s32.totalorder %s23, 0
      %p50 = por %p48, %p49
      %s51 = ssub.s32 %s17, %s24
      %p52 = scmp.eq.s32.totalorder %s51, 0
      %s54 = sadd.s32 %s53, 1
      %s55 = scalar_select %p52, %s53, %s54
      %p58 = pneg %p52
      %p59 = scmp.eq.s32.totalorder %s17, 1
      %p60 = por %p58, %p59
      %p61 = scmp.ne.s32.totalorder %s53, %s56
      %p62 = scmp.eq.s32.totalorder %s17, 0
      %p63 = por %p61, %p62
      %p64 = scmp.ne.s32.totalorder %s53, %s56
      %p65 = scmp.eq.s32.totalorder %s22, 1
      %p66 = por %p64, %p65
      %p67 = scmp.ne.s32.totalorder %s56, %s57
      %p68 = scmp.eq.s32.totalorder %s22, 0
      %p69 = por %p67, %p68
      %p70 = scmp.ne.s32.totalorder %s56, %s57
      %p71 = scmp.eq.s32.totalorder %s23, 1
      %p72 = por %p70, %p71
      %p74 = scmp.ne.s32.totalorder %s57, %s73
      %p75 = scmp.eq.s32.totalorder %s23, 0
      %p76 = por %p74, %p75
      %s77 = ssub.s32 %s17, %s24
      %p78 = scmp.eq.s32.totalorder %s77, 0
      %s80 = sadd.s32 %s79, 1
      %s81 = scalar_select %p78, %s79, %s80
      %p84 = pneg %p78
      %p85 = scmp.eq.s32.totalorder %s17, 1
      %p86 = por %p84, %p85
      %p87 = scmp.ne.s32.totalorder %s79, %s82
      %p88 = scmp.eq.s32.totalorder %s17, 0
      %p89 = por %p87, %p88
      %p90 = scmp.ne.s32.totalorder %s79, %s82
      %p91 = scmp.eq.s32.totalorder %s22, 1
      %p92 = por %p90, %p91
      %p93 = scmp.ne.s32.totalorder %s82, %s83
      %p94 = scmp.eq.s32.totalorder %s22, 0
      %p95 = por %p93, %p94
      %p96 = scmp.ne.s32.totalorder %s82, %s83
      %p97 = scmp.eq.s32.totalorder %s23, 1
      %p98 = por %p96, %p97
      %p100 = scmp.ne.s32.totalorder %s83, %s99
      %p101 = scmp.eq.s32.totalorder %s23, 0
      %p102 = por %p100, %p101
      %p103 = scmp.le.s32.totalorder 1, %s17
      %p104 = scmp.lt.s32.totalorder %s17, 3
      %p105 = pnand %p103, %p104
      %p106 = pneg %p105
      // Predicated region
      $region9: #{tpu_custom_call.1} parent=5 // pred_check
        _
      $region10: #{tpu_custom_call.1} parent=5 // pred_check_branch
        %108 = sbr.rel (%p105) target = $region12
      $region11: #{tpu_custom_call.1} parent=5 // pred_region
        %s109 = ssub.s32 %s17, 1
      $region12: #{tpu_custom_call.1} parent=5 // pred_fallthru
        _
      %p110 = scmp.lt.s32.totalorder %s17, 2
      // Predicated region
      $region13: #{tpu_custom_call.1} parent=5 // pred_check
        %p111 = pneg %p110
      $region14: #{tpu_custom_call.1} parent=5 // pred_check_branch
        %113 = sbr.rel (%p111) target = $region16
      $region15: #{tpu_custom_call.1} parent=5 // pred_region
        // Predicated region
        $region17: #{tpu_custom_call.1} parent=15 // pred_check
          %p114 = pneg %p37
        $region18: #{tpu_custom_call.1} parent=15 // pred_check_branch
          %116 = sbr.rel (%p114) target = $region20
        $region19: #{tpu_custom_call.1} parent=15 // pred_region
          %s117 = sand.u32 %s27, 1
          %s118 = scalar_lea.sflag [#allocation3], %s117
          %s119 = sand.u32 %s27, 1
          %s120 = smul.addr %s119, 8
          %s121 = scalar_lea.vmem [#allocation2], %s120
          %123 = vsyncadd %s118, 0
          %s124 = smul.addr %s17, 8
          %s125 = scalar_lea.hbm %s0, %s124
          %s127 = sshll.u32 %s125, 4
          %s128 = int_to_ptr.hbm [resolvable:$true] %s127
          %s129 = sshll.u32 %s121, 4
          %s130 = int_to_ptr.vmem [resolvable:$true] %s129
          %132 = dma.hbm_to_vmem [thread:$0]  %s128, 128, %s130, %s118
        $region20: #{tpu_custom_call.1} parent=15 // pred_fallthru
          _
        // Predicated region
        $region21: #{tpu_custom_call.1} parent=15 // pred_check
          %p133 = pneg %p63
        $region22: #{tpu_custom_call.1} parent=15 // pred_check_branch
          %135 = sbr.rel (%p133) target = $region24
        $region23: #{tpu_custom_call.1} parent=15 // pred_region
          %s136 = sand.u32 %s53, 1
          %s137 = scalar_lea.sflag [#allocation6], %s136
          %s138 = sand.u32 %s53, 1
          %s139 = smul.addr %s138, 8
          %s140 = scalar_lea.vmem [#allocation5], %s139
          %142 = vsyncadd %s137, 0
          %s143 = smul.addr %s17, 8
          %s144 = scalar_lea.hbm %s1, %s143
          %s146 = sshll.u32 %s144, 4
          %s147 = int_to_ptr.hbm [resolvable:$true] %s146
          %s148 = sshll.u32 %s140, 4
          %s149 = int_to_ptr.vmem [resolvable:$true] %s148
          %151 = dma.hbm_to_vmem [thread:$0]  %s147, 128, %s149, %s137
        $region24: #{tpu_custom_call.1} parent=15 // pred_fallthru
          _
      $region16: #{tpu_custom_call.1} parent=5 // pred_fallthru
        _
      %p152 = scmp.le.s32.totalorder 1, %s17
      %p153 = scmp.lt.s32.totalorder %s17, 3
      %p154 = pnand %p152, %p153
      %p155 = pneg %p154
      // Predicated region
      $region25: #{tpu_custom_call.1} parent=5 // pred_check
        _
      $region26: #{tpu_custom_call.1} parent=5 // pred_check_branch
        %157 = sbr.rel (%p154) target = $region28
      $region27: #{tpu_custom_call.1} parent=5 // pred_region
        %s158 = ssub.s32 %s17, 1
        %s159 = sand.u32 %s30, 1
        %s160 = scalar_lea.sflag [#allocation3], %s159
        %s161 = sand.u32 %s30, 1
        %s162 = smul.addr %s161, 8
        %s163 = scalar_lea.vmem [#allocation2], %s162
        // Predicated region
        $region29: #{tpu_custom_call.1} parent=27 // pred_check
          %p164 = pneg %p43
        $region30: #{tpu_custom_call.1} parent=27 // pred_check_branch
          %166 = sbr.rel (%p164) target = $region32
        $region31: #{tpu_custom_call.1} parent=27 // pred_region
          %168 = dma.done %s160, 128
        $region32: #{tpu_custom_call.1} parent=27 // pred_fallthru
          _
        %s169 = sand.u32 %s56, 1
        %s170 = scalar_lea.sflag [#allocation6], %s169
        %s171 = sand.u32 %s56, 1
        %s172 = smul.addr %s171, 8
        %s173 = scalar_lea.vmem [#allocation5], %s172
        // Predicated region
        $region33: #{tpu_custom_call.1} parent=27 // pred_check
          %p174 = pneg %p69
        $region34: #{tpu_custom_call.1} parent=27 // pred_check_branch
          %176 = sbr.rel (%p174) target = $region36
        $region35: #{tpu_custom_call.1} parent=27 // pred_region
          %178 = dma.done %s170, 128
        $region36: #{tpu_custom_call.1} parent=27 // pred_fallthru
          _
        %s179 = sand.u32 %s30, 1
        %s180 = scalar_lea.sflag [#allocation3], %s179
        %s181 = sand.u32 %s30, 1
        %s182 = smul.addr %s181, 8
        %s183 = scalar_lea.vmem [#allocation2], %s182
        %p184 = pneg %p43
        %p185 = pneg %p40
        %s186 = sand.u32 %s56, 1
        %s187 = scalar_lea.sflag [#allocation6], %s186
        %s188 = sand.u32 %s56, 1
        %s189 = smul.addr %s188, 8
        %s190 = scalar_lea.vmem [#allocation5], %s189
        %p191 = pneg %p69
        %p192 = pneg %p66
        %p193 = pneg %p95
        %p194 = pneg %p92
        %s195 = sand.u32 %s82, 1
        %s196 = scalar_lea.sflag [#allocation4], %s195
        %s197 = sand.u32 %s82, 1
        %s198 = smul.addr %s197, 8
        %s199 = scalar_lea.vmem [#allocation7], %s198
        %v200 = vld [vmem:[%s163] sm:$0xff]
        %v201 = vld [vmem:[%s173] sm:$0xff]
        %v202 = vsub.f32 %v200, %v201
        %v203 = vand.u32 2147483647, %v202
        %v204 = vadd.f32 %v203, 0.0
        %205 = vst [vmem:[%s199] sm:$0xff] %v204
        %s206 = sand.u32 %s82, 1
        %s207 = scalar_lea.sflag [#allocation4], %s206
        %s208 = sand.u32 %s82, 1
        %s209 = smul.addr %s208, 8
        %s210 = scalar_lea.vmem [#allocation7], %s209
        // Predicated region
        $region37: #{tpu_custom_call.1} parent=27 // pred_check
          %p211 = pneg %p92
        $region38: #{tpu_custom_call.1} parent=27 // pred_check_branch
          %213 = sbr.rel (%p211) target = $region40
        $region39: #{tpu_custom_call.1} parent=27 // pred_region
          %215 = vsyncadd %s207, 0
          %s216 = smul.addr %s22, 8
          %s217 = scalar_lea.hbm %s2, %s216
          %s219 = sshll.u32 %s210, 4
          %s220 = int_to_ptr.vmem [resolvable:$true] %s219
          %s221 = sshll.u32 %s217, 4
          %s222 = int_to_ptr.hbm [resolvable:$true] %s221
          %224 = dma.vmem_to_hbm [thread:$0]  %s220, 128, %s222, %s207
        $region40: #{tpu_custom_call.1} parent=27 // pred_fallthru
          _
      $region28: #{tpu_custom_call.1} parent=5 // pred_fallthru
        _
      %p225 = scmp.le.s32.totalorder 2, %s17
      // Predicated region
      $region41: #{tpu_custom_call.1} parent=5 // pred_check
        %p226 = pneg %p225
      $region42: #{tpu_custom_call.1} parent=5 // pred_check_branch
        %228 = sbr.rel (%p226) target = $region44
      $region43: #{tpu_custom_call.1} parent=5 // pred_region
        %s229 = ssub.s32 %s17, 2
        // Predicated region
        $region45: #{tpu_custom_call.1} parent=43 // pred_check
          %p230 = pneg %p98
        $region46: #{tpu_custom_call.1} parent=43 // pred_check_branch
          %232 = sbr.rel (%p230) target = $region48
        $region47: #{tpu_custom_call.1} parent=43 // pred_region
          %s233 = sand.u32 %s83, 1
          %s234 = scalar_lea.sflag [#allocation4], %s233
          %s235 = sand.u32 %s83, 1
          %s236 = smul.addr %s235, 8
          %s237 = scalar_lea.vmem [#allocation7], %s236
          %239 = dma.done %s234, 128
        $region48: #{tpu_custom_call.1} parent=43 // pred_fallthru
          _
      $region44: #{tpu_custom_call.1} parent=5 // pred_fallthru
        _
    $region6: #{tpu_custom_call.1} parent=1 // loop_footer
      %s21 = sadd.s32 1, %s17
    $region7: #{tpu_custom_call.1} parent=1 // loop_footer_branch
      %16 = sbr.rel target = $region3
    $region8: #{tpu_custom_call.1} parent=1 // loop_exit
      _
    %240 = vsyncpa [#allocation3], 1
    %s241 = scalar_lea.sflag [#allocation3], 1
    %242 = vsyncpa %s241, 1
    %243 = vsyncpa [#allocation6], 1
    %s244 = scalar_lea.sflag [#allocation6], 1
    %245 = vsyncpa %s244, 1
    %246 = vsyncpa [#allocation4], 1
    %s247 = scalar_lea.sflag [#allocation4], 1
    %248 = vsyncpa %s247, 1

</llo_original>
